<compile_context>
chip_gen: v6e
topology: v6e:2x2x1
jax: 0.10.0
libtpu: 0.0.40
codegen_flags: <defaults>
</compile_context>

<pallas_src>
import jax
import jax.numpy as jnp
from jax.experimental import pallas as pl
from jax.experimental.pallas import tpu as pltpu

LANES = 512  # lane-dense last block dim (multiple of 128)


def simplenet_kernel(p_ref, x_ref, o_ref):
    """p_ref: (17,) f32 in SMEM   [w1 (8), b1 (4), w2 (4), b2 (1)]
       x_ref: (2, S_TILE, LANES) f32 in VMEM  -- feature-planar batch tile
       o_ref: (S_TILE, LANES) f32 in VMEM     -- lane-dense output tile
    """
    x0 = x_ref[0]                       # (S_TILE, LANES)  feature 0
    x1 = x_ref[1]                       # (S_TILE, LANES)  feature 1

    acc = jnp.zeros_like(x0)
    # Hidden dim of 4, fully unrolled: ~29 VPU ops/sample, no MXU, no XLU.
    for j in range(4):
        h = p_ref[j] * x0 + p_ref[4 + j] * x1 + p_ref[8 + j]   # fc1 row j + b1[j]
        h = jnp.maximum(h, 0.0)                                  # ReLU
        acc = acc + p_ref[12 + j] * h                            # fc2 contraction

    o_ref[...] = acc + p_ref[16]                                 # + b2


def pack_params(w1, b1, w2, b2):
    """Pack all 17 parameters into one small f32 vector for SMEM."""
    return jnp.concatenate([
        jnp.reshape(w1, (-1,)),      # 8  : w1[0,0..3], w1[1,0..3]
        jnp.reshape(b1, (-1,)),      # 4
        jnp.reshape(w2, (-1,)),      # 4
        jnp.reshape(b2, (-1,)),      # 1
    ]).astype(jnp.float32)


def simplenet_forward_planar(x_planar, params, *, sublane_tile):
    """x_planar: (2, R, LANES) f32 with R a multiple of sublane_tile.
       Returns (R, LANES) f32."""
    _, R, L = x_planar.shape
    num_tiles = R // sublane_tile

    return pl.pallas_call(
        simplenet_kernel,
        out_shape=jax.ShapeDtypeStruct((R, L), jnp.float32),
        grid=(num_tiles,),
        in_specs=[
            pl.BlockSpec(memory_space=pltpu.MemorySpace.SMEM),        # params
            pl.BlockSpec((2, sublane_tile, L), lambda i: (0, i, 0)),  # x tile
        ],
        out_specs=pl.BlockSpec((sublane_tile, L), lambda i: (i, 0)),  # y tile
        compiler_params=pltpu.CompilerParams(
            dimension_semantics=("parallel",),       # shard steps across TCs (v7x)
            vmem_limit_bytes=32 * 1024 * 1024,       # headroom; ~12 MiB working set
        ),
        cost_estimate=pl.CostEstimate(
            flops=29 * R * L,
            transcendentals=0,
            bytes_accessed=(2 * R * L + R * L + 17) * 4,
        ),
    )(params, x_planar)


def simplenet_forward(x, w1, b1, w2, b2, *, sublane_tile=1024, lanes=LANES):
    """x: (B, 2) f32 (PyTorch layout). Returns (B, 1) f32.

    Default tile: (sublane_tile=1024, lanes=512) => 512K samples / 4 MiB of
    input per grid step.  For small B the sublane tile shrinks to the padded
    row count (multiple of 8)."""
    B = x.shape[0]
    params = pack_params(w1, b1, w2, b2)

    # Batch -> 2-D (rows, lanes) plane; pick the sublane tile (multiple of 8).
    rows = pl.cdiv(B, lanes)
    sublane_tile = pl.cdiv(sublane_tile, 8) * 8
    st = max(8, min(sublane_tile, pl.cdiv(rows, 8) * 8))
    rows_pad = pl.cdiv(rows, st) * st
    B_pad = rows_pad * lanes

    # Cast + pad + planarize: a single fused copy under jit.  Callers that can
    # supply feature-planar (2, rows_pad, lanes) input should skip this and
    # call simplenet_forward_planar directly.
    x_f32 = x.astype(jnp.float32)
    if B_pad != B:
        x_f32 = jnp.pad(x_f32, ((0, B_pad - B), (0, 0)))
    x_planar = x_f32.reshape(rows_pad, lanes, 2).transpose(2, 0, 1)

    y_planar = simplenet_forward_planar(x_planar, params, sublane_tile=st)

    # Sample b lives at (b // lanes, b % lanes); strip padding, return (B, 1).
    return y_planar.reshape(B_pad, 1)[:B]


def init_params(key):
    # Shapes from SimpleNet.__init__ (weights stored transposed vs PyTorch):
    #   fc1: weight (4, 2) -> W1 (2, 4), bias (4,)
    #   fc2: weight (1, 4) -> W2 (4, 1), bias (1,)
    k1, k2, k3, k4 = jax.random.split(key, 4)
    w1 = jax.random.normal(k1, (2, 4), dtype=jnp.float32) * 0.5
    b1 = jax.random.normal(k2, (4,), dtype=jnp.float32) * 0.1
    w2 = jax.random.normal(k3, (4, 1), dtype=jnp.float32) * 0.5
    b2 = jax.random.normal(k4, (1,), dtype=jnp.float32) * 0.1
    return w1, b1, w2, b2


if __name__ == "__main__":
    key = jax.random.PRNGKey(0)
    kx, kp = jax.random.split(key)

    B = 8  # small batch for the demo
    x = jax.random.normal(kx, (B, 2), dtype=jnp.float32)
    w1, b1, w2, b2 = init_params(kp)

    fwd = jax.jit(simplenet_forward)
    y = fwd(x, w1, b1, w2, b2)
    jax.block_until_ready(y)

    # Reference check in plain JAX.
    y_ref = jnp.maximum(x @ w1 + b1, 0.0) @ w2 + b2
    assert y.shape == (B, 1)
    assert jnp.allclose(y, y_ref, atol=1e-5), "mismatch vs reference"

    print("KERNEL_OK")
</pallas_src>

<mosaic_0001>
module attributes {stable_mosaic.version = 11 : i64} {
  func.func @simplenet_kernel(%arg0: i32, %arg1: memref<17xf32, #tpu.memory_space<smem>>, %arg2: memref<2x8x512xf32, #tpu.memory_space<vmem>>, %arg3: memref<8x512xf32, #tpu.memory_space<vmem>>) attributes {dimension_semantics = [#tpu.dimension_semantics<parallel>], iteration_bounds = array<i64: 1>, scalar_prefetch = 0 : i64, scratch_operands = 0 : i64, tpu.core_type = #tpu.core_type<tc>, window_params = [{transform_indices = @transform_0, window_bounds = array<i64: 17>}, {transform_indices = @transform_1, window_bounds = array<i64: 2, 8, 512>}, {transform_indices = @transform_2, window_bounds = array<i64: 8, 512>}]} {
    %c0 = arith.constant 0 : index
    %c0_0 = arith.constant 0 : index
    %c0_1 = arith.constant 0 : index
    %0 = vector.load %arg2[%c0, %c0_0, %c0_1] : memref<2x8x512xf32, #tpu.memory_space<vmem>>, vector<1x8x512xf32>
    %1 = vector.shape_cast %0 : vector<1x8x512xf32> to vector<8x512xf32>
    %c1 = arith.constant 1 : index
    %c0_2 = arith.constant 0 : index
    %c0_3 = arith.constant 0 : index
    %2 = vector.load %arg2[%c1, %c0_2, %c0_3] : memref<2x8x512xf32, #tpu.memory_space<vmem>>, vector<1x8x512xf32>
    %3 = vector.shape_cast %2 : vector<1x8x512xf32> to vector<8x512xf32>
    %cst = arith.constant 0.000000e+00 : f32
    %4 = vector.broadcast %cst : f32 to vector<8x512xf32>
    %c0_4 = arith.constant 0 : index
    %5 = memref.load %arg1[%c0_4] : memref<17xf32, #tpu.memory_space<smem>>
    %6 = vector.broadcast %5 : f32 to vector<8x512xf32>
    %7 = arith.mulf %6, %1 : vector<8x512xf32>
    %c4 = arith.constant 4 : index
    %8 = memref.load %arg1[%c4] : memref<17xf32, #tpu.memory_space<smem>>
    %9 = vector.broadcast %8 : f32 to vector<8x512xf32>
    %10 = arith.mulf %9, %3 : vector<8x512xf32>
    %11 = arith.addf %7, %10 : vector<8x512xf32>
    %c8 = arith.constant 8 : index
    %12 = memref.load %arg1[%c8] : memref<17xf32, #tpu.memory_space<smem>>
    %13 = vector.broadcast %12 : f32 to vector<8x512xf32>
    %14 = arith.addf %11, %13 : vector<8x512xf32>
    %cst_5 = arith.constant 0.000000e+00 : f32
    %15 = vector.broadcast %cst_5 : f32 to vector<8x512xf32>
    %16 = arith.maximumf %14, %15 : vector<8x512xf32>
    %c12 = arith.constant 12 : index
    %17 = memref.load %arg1[%c12] : memref<17xf32, #tpu.memory_space<smem>>
    %18 = vector.broadcast %17 : f32 to vector<8x512xf32>
    %19 = arith.mulf %18, %16 : vector<8x512xf32>
    %20 = arith.addf %4, %19 : vector<8x512xf32>
    %c1_6 = arith.constant 1 : index
    %21 = memref.load %arg1[%c1_6] : memref<17xf32, #tpu.memory_space<smem>>
    %22 = vector.broadcast %21 : f32 to vector<8x512xf32>
    %23 = arith.mulf %22, %1 : vector<8x512xf32>
    %c5 = arith.constant 5 : index
    %24 = memref.load %arg1[%c5] : memref<17xf32, #tpu.memory_space<smem>>
    %25 = vector.broadcast %24 : f32 to vector<8x512xf32>
    %26 = arith.mulf %25, %3 : vector<8x512xf32>
    %27 = arith.addf %23, %26 : vector<8x512xf32>
    %c9 = arith.constant 9 : index
    %28 = memref.load %arg1[%c9] : memref<17xf32, #tpu.memory_space<smem>>
    %29 = vector.broadcast %28 : f32 to vector<8x512xf32>
    %30 = arith.addf %27, %29 : vector<8x512xf32>
    %cst_7 = arith.constant 0.000000e+00 : f32
    %31 = vector.broadcast %cst_7 : f32 to vector<8x512xf32>
    %32 = arith.maximumf %30, %31 : vector<8x512xf32>
    %c13 = arith.constant 13 : index
    %33 = memref.load %arg1[%c13] : memref<17xf32, #tpu.memory_space<smem>>
    %34 = vector.broadcast %33 : f32 to vector<8x512xf32>
    %35 = arith.mulf %34, %32 : vector<8x512xf32>
    %36 = arith.addf %20, %35 : vector<8x512xf32>
    %c2 = arith.constant 2 : index
    %37 = memref.load %arg1[%c2] : memref<17xf32, #tpu.memory_space<smem>>
    %38 = vector.broadcast %37 : f32 to vector<8x512xf32>
    %39 = arith.mulf %38, %1 : vector<8x512xf32>
    %c6 = arith.constant 6 : index
    %40 = memref.load %arg1[%c6] : memref<17xf32, #tpu.memory_space<smem>>
    %41 = vector.broadcast %40 : f32 to vector<8x512xf32>
    %42 = arith.mulf %41, %3 : vector<8x512xf32>
    %43 = arith.addf %39, %42 : vector<8x512xf32>
    %c10 = arith.constant 10 : index
    %44 = memref.load %arg1[%c10] : memref<17xf32, #tpu.memory_space<smem>>
    %45 = vector.broadcast %44 : f32 to vector<8x512xf32>
    %46 = arith.addf %43, %45 : vector<8x512xf32>
    %cst_8 = arith.constant 0.000000e+00 : f32
    %47 = vector.broadcast %cst_8 : f32 to vector<8x512xf32>
    %48 = arith.maximumf %46, %47 : vector<8x512xf32>
    %c14 = arith.constant 14 : index
    %49 = memref.load %arg1[%c14] : memref<17xf32, #tpu.memory_space<smem>>
    %50 = vector.broadcast %49 : f32 to vector<8x512xf32>
    %51 = arith.mulf %50, %48 : vector<8x512xf32>
    %52 = arith.addf %36, %51 : vector<8x512xf32>
    %c3 = arith.constant 3 : index
    %53 = memref.load %arg1[%c3] : memref<17xf32, #tpu.memory_space<smem>>
    %54 = vector.broadcast %53 : f32 to vector<8x512xf32>
    %55 = arith.mulf %54, %1 : vector<8x512xf32>
    %c7 = arith.constant 7 : index
    %56 = memref.load %arg1[%c7] : memref<17xf32, #tpu.memory_space<smem>>
    %57 = vector.broadcast %56 : f32 to vector<8x512xf32>
    %58 = arith.mulf %57, %3 : vector<8x512xf32>
    %59 = arith.addf %55, %58 : vector<8x512xf32>
    %c11 = arith.constant 11 : index
    %60 = memref.load %arg1[%c11] : memref<17xf32, #tpu.memory_space<smem>>
    %61 = vector.broadcast %60 : f32 to vector<8x512xf32>
    %62 = arith.addf %59, %61 : vector<8x512xf32>
    %cst_9 = arith.constant 0.000000e+00 : f32
    %63 = vector.broadcast %cst_9 : f32 to vector<8x512xf32>
    %64 = arith.maximumf %62, %63 : vector<8x512xf32>
    %c15 = arith.constant 15 : index
    %65 = memref.load %arg1[%c15] : memref<17xf32, #tpu.memory_space<smem>>
    %66 = vector.broadcast %65 : f32 to vector<8x512xf32>
    %67 = arith.mulf %66, %64 : vector<8x512xf32>
    %68 = arith.addf %52, %67 : vector<8x512xf32>
    %c16 = arith.constant 16 : index
    %69 = memref.load %arg1[%c16] : memref<17xf32, #tpu.memory_space<smem>>
    %70 = vector.broadcast %69 : f32 to vector<8x512xf32>
    %71 = arith.addf %68, %70 : vector<8x512xf32>
    %c0_10 = arith.constant 0 : index
    %c0_11 = arith.constant 0 : index
    %72 = vector.load %arg3[%c0_10, %c0_11] : memref<8x512xf32, #tpu.memory_space<vmem>>, vector<8x512xf32>
    tpu.vector_store %arg3[%c0_10, %c0_11], %71 {strides = array<i32>} : memref<8x512xf32, #tpu.memory_space<vmem>>, vector<8x512xf32>,
    return
  }
  func.func @transform_0(%arg0: i32) -> i32 {
    %c0_i32 = arith.constant 0 : i32
    %c0_i32_0 = arith.constant 0 : i32
    return %c0_i32 : i32
  }
  func.func @transform_1(%arg0: i32) -> (i32, i32, i32) {
    %c0_i32 = arith.constant 0 : i32
    %c0_i32_0 = arith.constant 0 : i32
    %c0_i32_1 = arith.constant 0 : i32
    return %c0_i32, %arg0, %c0_i32_0 : i32, i32, i32
  }
  func.func @transform_2(%arg0: i32) -> (i32, i32) {
    %c0_i32 = arith.constant 0 : i32
    %c0_i32_0 = arith.constant 0 : i32
    return %arg0, %c0_i32 : i32, i32
  }
}

</mosaic_0001>

<llo_original>
// kernel: simplenet_forward.1
$region0: #{simplenet_forward.1}
  #allocation0 [shape = 'u32[]', space=smem, size = 0x4, offset = 0x4, fixed_abs, tag = 'smem constant byte address 0x4 - core index']
  #allocation1 [shape = 'u32[144,128]{1,0:T(1,128)}', space=vmem, size = 0x12000, scoped, tag = 'internal scratch']
  %s0 = inlined_call_operand.vmem [shape: f32[17], index: 0, kind: input, shape index: {}]
  %s1 = inlined_call_operand.vmem [shape: f32[2,8,512], index: 1, kind: input, shape index: {}]
  %s2 = inlined_call_operand.vmem [shape: f32[8,512], index: 2, kind: output, shape index: {}]
  %s3 = sld [smem:[#allocation0]]
  $region22: #{simplenet_forward.1} parent=0
    _
  %s5 = ssub.s32 1, %s3
  %s6 = scalar_select 0, %s5, %s3
  $region1: #{simplenet_forward.1} parent=0
    #allocation2 [shape = 'u8[512]{0}', space=smem, size = 0x200, scoped, tag = 'input window, operand 0, single buffered']
    #allocation3 [shape = 's32[1]{0}', space=sflag, size = 0x4, scoped, tag = 'scoped memory for simplenet_forward.1']
    %7 = vsyncpa [#allocation3], 0
    // Predicated region
    $region2: #{simplenet_forward.1} parent=1 // pred_check
      _
    $region3: #{simplenet_forward.1} parent=1 // pred_check_branch
      %9 = sbr.rel (0) target = $region5
    $region4: #{simplenet_forward.1} parent=1 // pred_region
      %s11 = ssub.s32 16, 16
      %12 = vsyncadd [#allocation3], %s11
      %s14 = sshll.u32 %s0, 4
      %s15 = int_to_ptr.vmem [resolvable:$true] %s14
      %17 = dma.vmem_to_smem %s15, 16, [#allocation2], [#allocation3]
    $region5: #{simplenet_forward.1} parent=1 // pred_fallthru
      _
    // Predicated region
    $region6: #{simplenet_forward.1} parent=1 // pred_check
      _
    $region7: #{simplenet_forward.1} parent=1 // pred_check_branch
      %19 = sbr.rel (0) target = $region9
    $region8: #{simplenet_forward.1} parent=1 // pred_region
      _
    $region9: #{simplenet_forward.1} parent=1 // pred_fallthru
      _
    // Predicated region
    $region10: #{simplenet_forward.1} parent=1 // pred_check
      _
    $region11: #{simplenet_forward.1} parent=1 // pred_check_branch
      %21 = sbr.rel (0) target = $region13
    $region12: #{simplenet_forward.1} parent=1 // pred_region
      %22 = dma.done [#allocation3], 16
    $region13: #{simplenet_forward.1} parent=1 // pred_fallthru
      _
    %23 = sfence
    %v24 = vld [vmem:[%s1] sm:$0xff]
    %v25 = vld [vmem:[%s1 + $0x8] sm:$0xff]
    %v26 = vld [vmem:[%s1 + $0x10] sm:$0xff]
    %v27 = vld [vmem:[%s1 + $0x18] sm:$0xff]
    %s28 = scalar_lea.vmem %s1, 32
    %v29 = vld [vmem:[%s28] sm:$0xff]
    %v30 = vld [vmem:[%s28 + $0x8] sm:$0xff]
    %v31 = vld [vmem:[%s28 + $0x10] sm:$0xff]
    %v32 = vld [vmem:[%s28 + $0x18] sm:$0xff]
    %s33 = sld [smem:[#allocation2]]
    %v34 = vstv %s33
    %v35 = vmul.f32 %v34, %v24
    %v36 = vmul.f32 %v34, %v25
    %v37 = vmul.f32 %v34, %v26
    %v38 = vmul.f32 %v34, %v27
    %s39 = sld [smem:[#allocation2 + $0x4]]
    %v40 = vstv %s39
    %v41 = vmul.f32 %v40, %v29
    %v42 = vmul.f32 %v40, %v30
    %v43 = vmul.f32 %v40, %v31
    %v44 = vmul.f32 %v40, %v32
    %v45 = vadd.f32 %v35, %v41
    %v46 = vadd.f32 %v36, %v42
    %v47 = vadd.f32 %v37, %v43
    %v48 = vadd.f32 %v38, %v44
    %s49 = sld [smem:[#allocation2 + $0x8]]
    %v50 = vstv %s49
    %v51 = vadd.f32 %v45, %v50
    %v52 = vadd.f32 %v46, %v50
    %v53 = vadd.f32 %v47, %v50
    %v54 = vadd.f32 %v48, %v50
    %v55 = vmax.f32 %v51, 0.0
    %v56 = vmax.f32 %v52, 0.0
    %v57 = vmax.f32 %v53, 0.0
    %v58 = vmax.f32 %v54, 0.0
    %s59 = sld [smem:[#allocation2 + $0xc]]
    %v60 = vstv %s59
    %v61 = vmul.f32 %v60, %v55
    %v62 = vmul.f32 %v60, %v56
    %v63 = vmul.f32 %v60, %v57
    %v64 = vmul.f32 %v60, %v58
    %v65 = vadd.f32 %v61, 0.0
    %v66 = vadd.f32 %v62, 0.0
    %v67 = vadd.f32 %v63, 0.0
    %v68 = vadd.f32 %v64, 0.0
    %s69 = sld [smem:[#allocation2 + $0x1]]
    %v70 = vstv %s69
    %v71 = vmul.f32 %v70, %v24
    %v72 = vmul.f32 %v70, %v25
    %v73 = vmul.f32 %v70, %v26
    %v74 = vmul.f32 %v70, %v27
    %s75 = sld [smem:[#allocation2 + $0x5]]
    %v76 = vstv %s75
    %v77 = vmul.f32 %v76, %v29
    %v78 = vmul.f32 %v76, %v30
    %v79 = vmul.f32 %v76, %v31
    %v80 = vmul.f32 %v76, %v32
    %v81 = vadd.f32 %v71, %v77
    %v82 = vadd.f32 %v72, %v78
    %v83 = vadd.f32 %v73, %v79
    %v84 = vadd.f32 %v74, %v80
    %s85 = sld [smem:[#allocation2 + $0x9]]
    %v86 = vstv %s85
    %v87 = vadd.f32 %v81, %v86
    %v88 = vadd.f32 %v82, %v86
    %v89 = vadd.f32 %v83, %v86
    %v90 = vadd.f32 %v84, %v86
    %v91 = vmax.f32 %v87, 0.0
    %v92 = vmax.f32 %v88, 0.0
    %v93 = vmax.f32 %v89, 0.0
    %v94 = vmax.f32 %v90, 0.0
    %s95 = sld [smem:[#allocation2 + $0xd]]
    %v96 = vstv %s95
    %v97 = vmul.f32 %v96, %v91
    %v98 = vmul.f32 %v96, %v92
    %v99 = vmul.f32 %v96, %v93
    %v100 = vmul.f32 %v96, %v94
    %v101 = vadd.f32 %v65, %v97
    %v102 = vadd.f32 %v66, %v98
    %v103 = vadd.f32 %v67, %v99
    %v104 = vadd.f32 %v68, %v100
    %s105 = sld [smem:[#allocation2 + $0x2]]
    %v106 = vstv %s105
    %v107 = vmul.f32 %v106, %v24
    %v108 = vmul.f32 %v106, %v25
    %v109 = vmul.f32 %v106, %v26
    %v110 = vmul.f32 %v106, %v27
    %s111 = sld [smem:[#allocation2 + $0x6]]
    %v112 = vstv %s111
    %v113 = vmul.f32 %v112, %v29
    %v114 = vmul.f32 %v112, %v30
    %v115 = vmul.f32 %v112, %v31
    %v116 = vmul.f32 %v112, %v32
    %v117 = vadd.f32 %v107, %v113
    %v118 = vadd.f32 %v108, %v114
    %v119 = vadd.f32 %v109, %v115
    %v120 = vadd.f32 %v110, %v116
    %s121 = sld [smem:[#allocation2 + $0xa]]
    %v122 = vstv %s121
    %v123 = vadd.f32 %v117, %v122
    %v124 = vadd.f32 %v118, %v122
    %v125 = vadd.f32 %v119, %v122
    %v126 = vadd.f32 %v120, %v122
    %v127 = vmax.f32 %v123, 0.0
    %v128 = vmax.f32 %v124, 0.0
    %v129 = vmax.f32 %v125, 0.0
    %v130 = vmax.f32 %v126, 0.0
    %s131 = sld [smem:[#allocation2 + $0xe]]
    %v132 = vstv %s131
    %v133 = vmul.f32 %v132, %v127
    %v134 = vmul.f32 %v132, %v128
    %v135 = vmul.f32 %v132, %v129
    %v136 = vmul.f32 %v132, %v130
    %v137 = vadd.f32 %v101, %v133
    %v138 = vadd.f32 %v102, %v134
    %v139 = vadd.f32 %v103, %v135
    %v140 = vadd.f32 %v104, %v136
    %s141 = sld [smem:[#allocation2 + $0x3]]
    %v142 = vstv %s141
    %v143 = vmul.f32 %v142, %v24
    %v144 = vmul.f32 %v142, %v25
    %v145 = vmul.f32 %v142, %v26
    %v146 = vmul.f32 %v142, %v27
    %s147 = sld [smem:[#allocation2 + $0x7]]
    %v148 = vstv %s147
    %v149 = vmul.f32 %v148, %v29
    %v150 = vmul.f32 %v148, %v30
    %v151 = vmul.f32 %v148, %v31
    %v152 = vmul.f32 %v148, %v32
    %v153 = vadd.f32 %v143, %v149
    %v154 = vadd.f32 %v144, %v150
    %v155 = vadd.f32 %v145, %v151
    %v156 = vadd.f32 %v146, %v152
    %s157 = sld [smem:[#allocation2 + $0xb]]
    %v158 = vstv %s157
    %v159 = vadd.f32 %v153, %v158
    %v160 = vadd.f32 %v154, %v158
    %v161 = vadd.f32 %v155, %v158
    %v162 = vadd.f32 %v156, %v158
    %v163 = vmax.f32 %v159, 0.0
    %v164 = vmax.f32 %v160, 0.0
    %v165 = vmax.f32 %v161, 0.0
    %v166 = vmax.f32 %v162, 0.0
    %s167 = sld [smem:[#allocation2 + $0xf]]
    %v168 = vstv %s167
    %v169 = vmul.f32 %v168, %v163
    %v170 = vmul.f32 %v168, %v164
    %v171 = vmul.f32 %v168, %v165
    %v172 = vmul.f32 %v168, %v166
    %v173 = vadd.f32 %v137, %v169
    %v174 = vadd.f32 %v138, %v170
    %v175 = vadd.f32 %v139, %v171
    %v176 = vadd.f32 %v140, %v172
    %s177 = sld [smem:[#allocation2 + $0x10]]
    %v178 = vstv %s177
    %v179 = vadd.f32 %v173, %v178
    %v180 = vadd.f32 %v174, %v178
    %v181 = vadd.f32 %v175, %v178
    %v182 = vadd.f32 %v176, %v178
    %183 = vst [vmem:[%s2] sm:$0xff] %v179
    %184 = vst [vmem:[%s2 + $0x8] sm:$0xff] %v180
    %185 = vst [vmem:[%s2 + $0x10] sm:$0xff] %v181
    %186 = vst [vmem:[%s2 + $0x18] sm:$0xff] %v182
    // Predicated region
    $region14: #{simplenet_forward.1} parent=1 // pred_check
      _
    $region15: #{simplenet_forward.1} parent=1 // pred_check_branch
      %188 = sbr.rel (0) target = $region17
    $region16: #{simplenet_forward.1} parent=1 // pred_region
      _
    $region17: #{simplenet_forward.1} parent=1 // pred_fallthru
      _
    // Predicated region
    $region18: #{simplenet_forward.1} parent=1 // pred_check
      _
    $region19: #{simplenet_forward.1} parent=1 // pred_check_branch
      %190 = sbr.rel (0) target = $region21
    $region20: #{simplenet_forward.1} parent=1 // pred_region
      _
    $region21: #{simplenet_forward.1} parent=1 // pred_fallthru
      _
    %191 = vsyncpa [#allocation3], 1

</llo_original>
